<compile_context>
chip_gen: v5e
topology: v5e:2x2
jax: 0.10.0
libtpu: 0.0.40
codegen_flags: <defaults>
</compile_context>

<pallas_src>
import functools

import numpy as np

import jax
import jax.numpy as jnp
from jax.experimental import pallas as pl
from jax.experimental.pallas import tpu as pltpu


def _round_up(v, m):
    return (v + m - 1) // m * m


# ---------------------------------------------------------------------------
# DDPM schedules (pure JAX glue; identical math to the PyTorch version)
# ---------------------------------------------------------------------------
def ddpm_schedules(beta1, beta2, T):
    assert beta1 < beta2 < 1.0, "beta1 and beta2 must be in (0, 1)"
    beta_t = (beta2 - beta1) * jnp.arange(0, T + 1, dtype=jnp.float32) / T + beta1
    sqrt_beta_t = jnp.sqrt(beta_t)
    alpha_t = 1.0 - beta_t
    log_alpha_t = jnp.log(alpha_t)
    alphabar_t = jnp.exp(jnp.cumsum(log_alpha_t))
    sqrtab = jnp.sqrt(alphabar_t)
    oneover_sqrta = 1.0 / jnp.sqrt(alpha_t)
    sqrtmab = jnp.sqrt(1.0 - alphabar_t)
    mab_over_sqrtmab_inv = (1.0 - alpha_t) / sqrtmab
    return {
        "alpha_t": alpha_t,
        "oneover_sqrta": oneover_sqrta,
        "sqrt_beta_t": sqrt_beta_t,
        "alphabar_t": alphabar_t,
        "sqrtab": sqrtab,
        "sqrtmab": sqrtmab,
        "mab_over_sqrtmab": mab_over_sqrtmab_inv,
    }


# ---------------------------------------------------------------------------
# Fused input-slab column layout (single DMA stream per batch tile):
#   [ x (D) | noise (D) | one_hot(c) (C) | t/n_T (1)
#     | sqrtab sqrtmab keep iptw valid (5) | zero pad ]
# The side / pad columns hit all-zero rows of the fused W1 so they are inert
# in the matmul; the noise columns hit a duplicated copy of W1x so the single
# dot computes (sqrtab*x + sqrtmab*noise) @ W1x.
# ---------------------------------------------------------------------------
def _fused_layout(data_dim, num_classes):
    col_noise = data_dim
    col_class = 2 * data_dim
    col_t = col_class + num_classes
    col_side = col_t + 1
    kp = _round_up(col_side + 5, 16)      # bf16-sublane / MXU friendly padding
    return dict(col_noise=col_noise, col_class=col_class, col_t=col_t,
                col_side=col_side, kp=kp)


def _pack_inputs(x, c, noise, _ts, sqrtab, sqrtmab, context_mask, iptw_weights,
                 n_T, num_classes):
    """Build the single fused (B, Kp) f32 slab consumed by the kernel."""
    B, D = x.shape
    lay = _fused_layout(D, num_classes)
    sab = sqrtab[_ts]                                      # (B,)
    smab = sqrtmab[_ts]                                    # (B,)
    onehot = jax.nn.one_hot(c, num_classes, dtype=jnp.float32)
    tnorm = _ts.astype(jnp.float32) / float(n_T)
    side = jnp.stack(
        [sab, smab, 1.0 - context_mask,                    # keep = 1 - mask
         iptw_weights.astype(jnp.float32),
         jnp.ones((B,), jnp.float32)],                     # valid = 1
        axis=1)
    pad_cols = lay["kp"] - (lay["col_side"] + 5)
    packed = jnp.concatenate(
        [x.astype(jnp.float32), noise.astype(jnp.float32), onehot,
         tnorm[:, None], side, jnp.zeros((B, pad_cols), jnp.float32)], axis=1)
    return packed, lay


# ---------------------------------------------------------------------------
# Fused Pallas kernel: q-sample + conditioned MLP + per-tile MSE partial sums
#
#   packed_ref : (TB, Kp) f32  fused slab (see _fused_layout)
#   w1_ref     : (Kp, H)  bf16 fused [W1x ; W1x(dup) ; W1c ; W1t ; 0]
#   b1_ref     : (1, H)   f32
#   w2_ref     : (H, D)   bf16
#   b2_ref     : (1, D)   f32
#   out_ref    : (1, 8, 128) f32  per-tile partials: [0,0,0]=sum(sq*valid),
#                                 [0,0,1]=sum(row_mean*iptw*valid)
# ---------------------------------------------------------------------------
def ddpm_loss_kernel(packed_ref, w1_ref, b1_ref, w2_ref, b2_ref, out_ref,
                     *, data_dim, num_classes):
    f32 = jnp.float32
    lay = _fused_layout(data_dim, num_classes)
    cs = lay["col_side"]

    packed = packed_ref[...]                               # (TB, Kp) f32
    kp = packed.shape[1]

    # Per-row side scalars from their fixed lane slots.
    sab = packed[:, cs + 0:cs + 1]                         # sqrtab[_ts]
    smab = packed[:, cs + 1:cs + 2]                        # sqrtmab[_ts]
    keep = packed[:, cs + 2:cs + 3]                        # 1 - context_mask
    iptw = packed[:, cs + 3:cs + 4]                        # IPTW weights
    valid = packed[:, cs + 4:cs + 5]                       # 1 real / 0 pad row

    # Constant single-vreg column masks (built on a (1, Kp) iota, then
    # broadcast against the per-row scalars -- arithmetic form, no nested
    # full-tile where).
    col = jax.lax.broadcasted_iota(jnp.int32, (1, kp), 1)
    xmask = (col < data_dim).astype(f32)
    nmask = jnp.logical_and(col >= lay["col_noise"],
                            col < lay["col_noise"] + data_dim).astype(f32)
    cmask = jnp.logical_and(col >= lay["col_class"],
                            col < lay["col_class"] + num_classes).astype(f32)
    tmask = (col == lay["col_t"]).astype(f32)

    # scale: sqrtab on x cols, sqrtmab on noise cols, keep on class cols,
    # 1 on the t column, 0 elsewhere (those W1 rows are zero anyway).
    scale = tmask + xmask * sab + nmask * smab + cmask * keep
    z = scale * packed                                     # fused q-sample+drop

    # Conditioned 2-layer MLP; bf16 operands on the MXU, f32 accumulation,
    # all elementwise math in f32 (v5e has no bf16 VPU).
    h = jnp.dot(z.astype(jnp.bfloat16), w1_ref[...],
                preferred_element_type=f32)
    h = jnp.maximum(h + b1_ref[...], 0.0)
    pred = jnp.dot(h.astype(jnp.bfloat16), w2_ref[...],
                   preferred_element_type=f32) + b2_ref[...]

    # MSE pieces against the (unscaled) noise columns of the slab.
    noise = packed[:, lay["col_noise"]:lay["col_noise"] + data_dim]  # (TB, D)
    diff = noise - pred
    sq = diff * diff                                       # (TB, D)
    row_sum = jnp.sum(sq, axis=1, keepdims=True) * valid   # (TB, 1)

    mse_partial = jnp.sum(row_sum)                             # sum of sq err
    iptw_partial = jnp.sum(row_sum * iptw) * (1.0 / data_dim)  # sum(mean*iptw)

    # Lane-dense per-tile partial-sum slab: [mse, iptw, 0, ...] in sublane 0.
    lane = jax.lax.broadcasted_iota(jnp.int32, (8, 128), 1)
    sub = jax.lax.broadcasted_iota(jnp.int32, (8, 128), 0)
    slab = jnp.where(jnp.logical_and(sub == 0, lane == 0), mse_partial,
                     jnp.where(jnp.logical_and(sub == 0, lane == 1),
                               iptw_partial, 0.0))
    out_ref[...] = slab[None]


def _run_loss_kernel(packed, params, *, data_dim, num_classes, tile_b):
    b_pad, kp = packed.shape
    hidden = params["b1"].shape[1]
    assert b_pad % tile_b == 0
    num_tiles = b_pad // tile_b

    kernel = functools.partial(
        ddpm_loss_kernel, data_dim=data_dim, num_classes=num_classes)

    # VMEM budget from the actual footprint: resident weights + double-buffered
    # fused slab + output blocks, with headroom (cap well under v7x's 64 MiB).
    weight_bytes = kp * hidden * 2 + hidden * 4 + hidden * data_dim * 2 + data_dim * 4
    vmem_est = 2 * (2 * tile_b * kp * 4) + 2 * weight_bytes + 2 * 8 * 128 * 4
    vmem_limit = int(min(max(vmem_est + (2 << 20), 8 << 20), 64 << 20))

    partials = pl.pallas_call(
        kernel,
        out_shape=jax.ShapeDtypeStruct((num_tiles, 8, 128), jnp.float32),
        grid_spec=pltpu.PrefetchScalarGridSpec(
            num_scalar_prefetch=0,
            grid=(num_tiles,),
            in_specs=[
                # single batch-tiled fused slab (double-buffered by Pallas)
                pl.BlockSpec((tile_b, kp), lambda i: (i, 0)),
                # weights: constant block index -> stay resident in VMEM
                pl.BlockSpec((kp, hidden), lambda i: (0, 0)),        # w1 bf16
                pl.BlockSpec((1, hidden), lambda i: (0, 0)),         # b1
                pl.BlockSpec((hidden, data_dim), lambda i: (0, 0)),  # w2 bf16
                pl.BlockSpec((1, data_dim), lambda i: (0, 0)),       # b2
            ],
            # per-tile partial sums, lane-dense, no carried accumulator
            out_specs=pl.BlockSpec((1, 8, 128), lambda i: (i, 0, 0)),
        ),
        compiler_params=pltpu.CompilerParams(
            # no cross-step state -> "parallel": both TCs on v7x can run it
            dimension_semantics=("parallel",),
            vmem_limit_bytes=vmem_limit,
        ),
    )(packed, params["w1"], params["b1"], params["w2"], params["b2"])
    return partials


# ---------------------------------------------------------------------------
# DDPM forward (training step) — glue around the fused kernel
# ---------------------------------------------------------------------------
@functools.partial(
    jax.jit,
    static_argnames=("n_T", "drop_prob", "num_classes", "use_iptw"))
def ddpm_forward(params, sqrtab, sqrtmab, x, c, iptw_weights, key,
                 n_T, drop_prob, num_classes, use_iptw):
    B, D = x.shape
    k_t, k_noise, k_mask = jax.random.split(key, 3)

    # _ts = torch.randint(1, n_T + 1, (B,)) ; noise = randn_like(x)
    _ts = jax.random.randint(k_t, (B,), 1, n_T + 1)
    noise = jax.random.normal(k_noise, x.shape, dtype=jnp.float32)
    # context_mask = torch.bernoulli(zeros_like(c) + drop_prob)
    context_mask = jax.random.bernoulli(k_mask, drop_prob, (B,)).astype(jnp.float32)

    packed, _ = _pack_inputs(x, c, noise, _ts, sqrtab, sqrtmab, context_mask,
                             iptw_weights, n_T, num_classes)

    # Batch tiling: as large as possible (full batch when small); pad rows to
    # a tile multiple -- padded rows have valid=0 so they contribute nothing.
    target_tile = 1024
    tile_b = _round_up(B, 8) if B <= target_tile else target_tile
    b_pad = _round_up(B, tile_b)
    if b_pad != B:
        packed = jnp.pad(packed, ((0, b_pad - B), (0, 0)))

    partials = _run_loss_kernel(
        packed, params, data_dim=D, num_classes=num_classes, tile_b=tile_b)

    mse = jnp.sum(partials[:, 0, 0]) / float(B * D)        # nn.MSELoss()
    iptw_loss = jnp.sum(partials[:, 0, 1]) / float(B)      # (mean(.,1)*iptw).mean()
    return iptw_loss if use_iptw else mse


# ---------------------------------------------------------------------------
# Pure-JAX reference (same random draws, same fused slab / bf16 casts)
# ---------------------------------------------------------------------------
def _reference_forward(params, sqrtab, sqrtmab, x, c, iptw_weights, key,
                       n_T, drop_prob, num_classes):
    B, D = x.shape
    k_t, k_noise, k_mask = jax.random.split(key, 3)
    _ts = jax.random.randint(k_t, (B,), 1, n_T + 1)
    noise = jax.random.normal(k_noise, x.shape, dtype=jnp.float32)
    context_mask = jax.random.bernoulli(k_mask, drop_prob, (B,)).astype(jnp.float32)

    packed, lay = _pack_inputs(x, c, noise, _ts, sqrtab, sqrtmab, context_mask,
                               iptw_weights, n_T, num_classes)
    kp = lay["kp"]
    cols = np.arange(kp)
    xm = (cols < D).astype(np.float32)[None]
    nm = ((cols >= D) & (cols < 2 * D)).astype(np.float32)[None]
    cm = ((cols >= lay["col_class"])
          & (cols < lay["col_class"] + num_classes)).astype(np.float32)[None]
    tm = (cols == lay["col_t"]).astype(np.float32)[None]
    cs = lay["col_side"]
    sab = packed[:, cs:cs + 1]
    smab = packed[:, cs + 1:cs + 2]
    keep = packed[:, cs + 2:cs + 3]
    scale = tm + xm * sab + nm * smab + cm * keep
    z = scale * packed
    h = jnp.maximum(jnp.dot(z.astype(jnp.bfloat16), params["w1"],
                            preferred_element_type=jnp.float32) + params["b1"], 0.0)
    pred = jnp.dot(h.astype(jnp.bfloat16), params["w2"],
                   preferred_element_type=jnp.float32) + params["b2"]
    sq = (noise - pred) ** 2
    mse = jnp.mean(sq)
    iptw_loss = jnp.mean(jnp.mean(sq, axis=1) * iptw_weights)
    return mse, iptw_loss


# ---------------------------------------------------------------------------
# Deterministic parameter construction for the synthetic nn_model
# (W1x / W1x-dup / W1c / W1t fused into one zero-padded (Kp, H) bf16 matrix)
# ---------------------------------------------------------------------------
def init_params(key, data_dim, num_classes, hidden):
    lay = _fused_layout(data_dim, num_classes)
    kp = lay["kp"]
    ks = jax.random.split(key, 4)
    k_in = data_dim + num_classes + 1
    s1 = 1.0 / float(np.sqrt(k_in))
    s2 = 1.0 / float(np.sqrt(hidden))

    w1x = jax.random.normal(ks[0], (data_dim, hidden), jnp.float32) * s1
    w1c = jax.random.normal(ks[1], (num_classes, hidden), jnp.float32) * s1
    w1t = jax.random.normal(ks[2], (hidden,), jnp.float32) * s1

    w1 = jnp.zeros((kp, hidden), jnp.float32)
    w1 = w1.at[:data_dim].set(w1x)
    # duplicate W1x under the noise columns -> single fused MXU pass does
    # (sqrtab*x + sqrtmab*noise) @ W1x
    w1 = w1.at[lay["col_noise"]:lay["col_noise"] + data_dim].set(w1x)
    w1 = w1.at[lay["col_class"]:lay["col_class"] + num_classes].set(w1c)
    w1 = w1.at[lay["col_t"]].set(w1t)

    w2 = jax.random.normal(ks[3], (hidden, data_dim), jnp.float32) * s2
    return {
        "w1": w1.astype(jnp.bfloat16),
        "b1": jnp.zeros((1, hidden), jnp.float32),
        "w2": w2.astype(jnp.bfloat16),
        "b2": jnp.zeros((1, data_dim), jnp.float32),
    }


if __name__ == "__main__":
    # Small, forward-consistent shapes (lane-dense hidden dim)
    B = 16           # batch
    D = 16           # 1-D data dimension
    NUM_CLASSES = 4  # 2**d with d = 2
    HIDDEN = 128
    N_T = 400
    BETAS = (1e-4, 0.02)
    DROP_PROB = 0.1

    root = jax.random.PRNGKey(0)
    k_param, k_x, k_c, k_iptw, k_fwd = jax.random.split(root, 5)

    params = init_params(k_param, D, NUM_CLASSES, HIDDEN)
    sched = ddpm_schedules(BETAS[0], BETAS[1], N_T)

    x = jax.random.normal(k_x, (B, D), jnp.float32)
    c = jax.random.randint(k_c, (B,), 0, NUM_CLASSES)
    iptw_weights = jax.random.uniform(k_iptw, (B,), jnp.float32, 0.5, 1.5)

    # iptw=False path: scalar nn.MSELoss()
    loss = ddpm_forward(params, sched["sqrtab"], sched["sqrtmab"],
                        x, c, iptw_weights, k_fwd,
                        n_T=N_T, drop_prob=DROP_PROB,
                        num_classes=NUM_CLASSES, use_iptw=False)
    loss = jax.block_until_ready(loss)
    assert bool(jnp.isfinite(loss)), "non-finite MSE loss"

    # iptw=True path: (mean(loss, dim=1) * iptw).mean()
    loss_iptw = ddpm_forward(params, sched["sqrtab"], sched["sqrtmab"],
                             x, c, iptw_weights, k_fwd,
                             n_T=N_T, drop_prob=DROP_PROB,
                             num_classes=NUM_CLASSES, use_iptw=True)
    loss_iptw = jax.block_until_ready(loss_iptw)
    assert bool(jnp.isfinite(loss_iptw)), "non-finite IPTW loss"

    # Correctness vs. pure-JAX reference with the same draws / bf16 casts.
    # (bf16 MXU operands -> ~1e-2 relative tolerance vs an all-f32 reference;
    # here the reference mirrors the casts so agreement is much tighter.)
    ref_mse, ref_iptw = _reference_forward(
        params, sched["sqrtab"], sched["sqrtmab"], x, c, iptw_weights, k_fwd,
        N_T, DROP_PROB, NUM_CLASSES)
    np.testing.assert_allclose(np.asarray(loss), np.asarray(ref_mse),
                               rtol=1e-2, atol=1e-5)
    np.testing.assert_allclose(np.asarray(loss_iptw), np.asarray(ref_iptw),
                               rtol=1e-2, atol=1e-5)

    print("KERNEL_OK")
</pallas_src>

<mosaic_0001>
module attributes {stable_mosaic.version = 11 : i64} {
  func.func @ddpm_loss_kernel(%arg0: i32, %arg1: memref<16x48xf32, #tpu.memory_space<vmem>>, %arg2: memref<48x128xbf16, #tpu.memory_space<vmem>>, %arg3: memref<1x128xf32, #tpu.memory_space<vmem>>, %arg4: memref<128x16xbf16, #tpu.memory_space<vmem>>, %arg5: memref<1x16xf32, #tpu.memory_space<vmem>>, %arg6: memref<1x8x128xf32, #tpu.memory_space<vmem>>) attributes {dimension_semantics = [#tpu.dimension_semantics<parallel>], iteration_bounds = array<i64: 1>, scalar_prefetch = 0 : i64, scratch_operands = 0 : i64, tpu.core_type = #tpu.core_type<tc>, window_params = [{transform_indices = @transform_0, window_bounds = array<i64: 16, 48>}, {pipeline_mode = #tpu.pipeline_mode<synchronous>, transform_indices = @transform_1, window_bounds = array<i64: 48, 128>}, {pipeline_mode = #tpu.pipeline_mode<synchronous>, transform_indices = @transform_2, window_bounds = array<i64: 1, 128>}, {pipeline_mode = #tpu.pipeline_mode<synchronous>, transform_indices = @transform_3, window_bounds = array<i64: 128, 16>}, {pipeline_mode = #tpu.pipeline_mode<synchronous>, transform_indices = @transform_4, window_bounds = array<i64: 1, 16>}, {transform_indices = @transform_5, window_bounds = array<i64: 1, 8, 128>}]} {
    %c0 = arith.constant 0 : index
    %c0_0 = arith.constant 0 : index
    %0 = vector.load %arg1[%c0, %c0_0] : memref<16x48xf32, #tpu.memory_space<vmem>>, vector<16x48xf32>
    %1 = vector.extract_strided_slice %0 {offsets = [0, 37], sizes = [16, 1], strides = [1, 1]} : vector<16x48xf32> to vector<16x1xf32>
    %2 = vector.extract_strided_slice %0 {offsets = [0, 38], sizes = [16, 1], strides = [1, 1]} : vector<16x48xf32> to vector<16x1xf32>
    %3 = vector.extract_strided_slice %0 {offsets = [0, 39], sizes = [16, 1], strides = [1, 1]} : vector<16x48xf32> to vector<16x1xf32>
    %4 = vector.extract_strided_slice %0 {offsets = [0, 40], sizes = [16, 1], strides = [1, 1]} : vector<16x48xf32> to vector<16x1xf32>
    %5 = vector.extract_strided_slice %0 {offsets = [0, 41], sizes = [16, 1], strides = [1, 1]} : vector<16x48xf32> to vector<16x1xf32>
    %6 = tpu.iota {dimensions = array<i32: 1>} : vector<1x48xi32>
    %c16_i32 = arith.constant 16 : i32
    %7 = vector.broadcast %c16_i32 : i32 to vector<1x48xi32>
    %8 = arith.cmpi slt, %6, %7 : vector<1x48xi32>
    %9 = arith.extui %8 : vector<1x48xi1> to vector<1x48xi32>
    %10 = arith.sitofp %9 : vector<1x48xi32> to vector<1x48xf32>
    %c16_i32_1 = arith.constant 16 : i32
    %11 = vector.broadcast %c16_i32_1 : i32 to vector<1x48xi32>
    %12 = arith.cmpi sge, %6, %11 : vector<1x48xi32>
    %c32_i32 = arith.constant 32 : i32
    %13 = vector.broadcast %c32_i32 : i32 to vector<1x48xi32>
    %14 = arith.cmpi slt, %6, %13 : vector<1x48xi32>
    %15 = arith.andi %12, %14 : vector<1x48xi1>
    %16 = arith.extui %15 : vector<1x48xi1> to vector<1x48xi32>
    %17 = arith.sitofp %16 : vector<1x48xi32> to vector<1x48xf32>
    %c32_i32_2 = arith.constant 32 : i32
    %18 = vector.broadcast %c32_i32_2 : i32 to vector<1x48xi32>
    %19 = arith.cmpi sge, %6, %18 : vector<1x48xi32>
    %c36_i32 = arith.constant 36 : i32
    %20 = vector.broadcast %c36_i32 : i32 to vector<1x48xi32>
    %21 = arith.cmpi slt, %6, %20 : vector<1x48xi32>
    %22 = arith.andi %19, %21 : vector<1x48xi1>
    %23 = arith.extui %22 : vector<1x48xi1> to vector<1x48xi32>
    %24 = arith.sitofp %23 : vector<1x48xi32> to vector<1x48xf32>
    %c36_i32_3 = arith.constant 36 : i32
    %25 = vector.broadcast %c36_i32_3 : i32 to vector<1x48xi32>
    %26 = arith.cmpi eq, %6, %25 : vector<1x48xi32>
    %27 = arith.extui %26 : vector<1x48xi1> to vector<1x48xi32>
    %28 = arith.sitofp %27 : vector<1x48xi32> to vector<1x48xf32>
    %29 = vector.broadcast %10 : vector<1x48xf32> to vector<16x48xf32>
    %30 = vector.broadcast %1 : vector<16x1xf32> to vector<16x48xf32>
    %31 = arith.mulf %29, %30 : vector<16x48xf32>
    %32 = vector.broadcast %28 : vector<1x48xf32> to vector<16x48xf32>
    %33 = arith.addf %32, %31 : vector<16x48xf32>
    %34 = vector.broadcast %17 : vector<1x48xf32> to vector<16x48xf32>
    %35 = vector.broadcast %2 : vector<16x1xf32> to vector<16x48xf32>
    %36 = arith.mulf %34, %35 : vector<16x48xf32>
    %37 = arith.addf %33, %36 : vector<16x48xf32>
    %38 = vector.broadcast %24 : vector<1x48xf32> to vector<16x48xf32>
    %39 = vector.broadcast %3 : vector<16x1xf32> to vector<16x48xf32>
    %40 = arith.mulf %38, %39 : vector<16x48xf32>
    %41 = arith.addf %37, %40 : vector<16x48xf32>
    %42 = arith.mulf %41, %0 : vector<16x48xf32>
    %43 = arith.truncf %42 : vector<16x48xf32> to vector<16x48xbf16>
    %c0_4 = arith.constant 0 : index
    %c0_5 = arith.constant 0 : index
    %44 = vector.load %arg2[%c0_4, %c0_5] : memref<48x128xbf16, #tpu.memory_space<vmem>>, vector<48x128xbf16>
    %cst = arith.constant dense<0.000000e+00> : vector<16x128xf32>
    %45 = tpu.matmul %43, %44, %cst {dimension_numbers = #tpu.dot_dimension_numbers<[1], [0], [0], [1], [0, 0, 1, 1], [], []>} : vector<16x48xbf16>, vector<48x128xbf16>, vector<16x128xf32> -> vector<16x128xf32>
    %c0_6 = arith.constant 0 : index
    %c0_7 = arith.constant 0 : index
    %46 = vector.load %arg3[%c0_6, %c0_7] : memref<1x128xf32, #tpu.memory_space<vmem>>, vector<1x128xf32>
    %47 = vector.broadcast %46 : vector<1x128xf32> to vector<16x128xf32>
    %48 = arith.addf %45, %47 : vector<16x128xf32>
    %cst_8 = arith.constant 0.000000e+00 : f32
    %49 = vector.broadcast %cst_8 : f32 to vector<16x128xf32>
    %50 = arith.maximumf %48, %49 : vector<16x128xf32>
    %51 = arith.truncf %50 : vector<16x128xf32> to vector<16x128xbf16>
    %c0_9 = arith.constant 0 : index
    %c0_10 = arith.constant 0 : index
    %52 = vector.load %arg4[%c0_9, %c0_10] : memref<128x16xbf16, #tpu.memory_space<vmem>>, vector<128x16xbf16>
    %cst_11 = arith.constant dense<0.000000e+00> : vector<16x16xf32>
    %53 = tpu.matmul %51, %52, %cst_11 {dimension_numbers = #tpu.dot_dimension_numbers<[1], [0], [0], [1], [0, 0, 1, 1], [], []>} : vector<16x128xbf16>, vector<128x16xbf16>, vector<16x16xf32> -> vector<16x16xf32>
    %c0_12 = arith.constant 0 : index
    %c0_13 = arith.constant 0 : index
    %54 = vector.load %arg5[%c0_12, %c0_13] : memref<1x16xf32, #tpu.memory_space<vmem>>, vector<1x16xf32>
    %55 = vector.broadcast %54 : vector<1x16xf32> to vector<16x16xf32>
    %56 = arith.addf %53, %55 : vector<16x16xf32>
    %57 = vector.extract_strided_slice %0 {offsets = [0, 16], sizes = [16, 16], strides = [1, 1]} : vector<16x48xf32> to vector<16x16xf32>
    %58 = arith.subf %57, %56 : vector<16x16xf32>
    %59 = arith.mulf %58, %58 : vector<16x16xf32>
    %cst_14 = arith.constant dense<0.000000e+00> : vector<16xf32>
    %60 = vector.multi_reduction <add>, %59, %cst_14 [1] : vector<16x16xf32> to vector<16xf32>
    %61 = vector.shape_cast %60 : vector<16xf32> to vector<16x1xf32>
    %62 = arith.mulf %61, %5 : vector<16x1xf32>
    %63 = vector.shape_cast %62 : vector<16x1xf32> to vector<1x16x1xf32>
    %cst_15 = arith.constant dense<0.000000e+00> : vector<1xf32>
    %64 = vector.multi_reduction <add>, %63, %cst_15 [1, 2] : vector<1x16x1xf32> to vector<1xf32>
    %65 = vector.shape_cast %64 : vector<1xf32> to vector<1x1x1xf32>
    %66 = vector.extract %65[0, 0, 0] : f32 from vector<1x1x1xf32>
    %67 = arith.mulf %62, %4 : vector<16x1xf32>
    %68 = vector.shape_cast %67 : vector<16x1xf32> to vector<1x16x1xf32>
    %cst_16 = arith.constant dense<0.000000e+00> : vector<1xf32>
    %69 = vector.multi_reduction <add>, %68, %cst_16 [1, 2] : vector<1x16x1xf32> to vector<1xf32>
    %70 = vector.shape_cast %69 : vector<1xf32> to vector<1x1x1xf32>
    %71 = vector.extract %70[0, 0, 0] : f32 from vector<1x1x1xf32>
    %cst_17 = arith.constant 6.250000e-02 : f32
    %72 = arith.mulf %71, %cst_17 : f32
    %73 = tpu.iota {dimensions = array<i32: 1>} : vector<8x128xi32>
    %74 = tpu.iota {dimensions = array<i32: 0>} : vector<8x128xi32>
    %c0_i32 = arith.constant 0 : i32
    %75 = vector.broadcast %c0_i32 : i32 to vector<8x128xi32>
    %76 = arith.cmpi eq, %74, %75 : vector<8x128xi32>
    %c0_i32_18 = arith.constant 0 : i32
    %77 = vector.broadcast %c0_i32_18 : i32 to vector<8x128xi32>
    %78 = arith.cmpi eq, %73, %77 : vector<8x128xi32>
    %79 = arith.andi %76, %78 : vector<8x128xi1>
    %c0_i32_19 = arith.constant 0 : i32
    %80 = vector.broadcast %c0_i32_19 : i32 to vector<8x128xi32>
    %81 = arith.cmpi eq, %74, %80 : vector<8x128xi32>
    %c1_i32 = arith.constant 1 : i32
    %82 = vector.broadcast %c1_i32 : i32 to vector<8x128xi32>
    %83 = arith.cmpi eq, %73, %82 : vector<8x128xi32>
    %84 = arith.andi %81, %83 : vector<8x128xi1>
    %cst_20 = arith.constant 0.000000e+00 : f32
    %85 = vector.broadcast %72 : f32 to vector<8x128xf32>
    %86 = vector.broadcast %cst_20 : f32 to vector<8x128xf32>
    %87 = arith.select %84, %85, %86 : vector<8x128xi1>, vector<8x128xf32>
    %88 = vector.broadcast %66 : f32 to vector<8x128xf32>
    %89 = arith.select %79, %88, %87 : vector<8x128xi1>, vector<8x128xf32>
    %90 = vector.shape_cast %89 : vector<8x128xf32> to vector<1x8x128xf32>
    %c0_21 = arith.constant 0 : index
    %c0_22 = arith.constant 0 : index
    %c0_23 = arith.constant 0 : index
    %91 = vector.load %arg6[%c0_21, %c0_22, %c0_23] : memref<1x8x128xf32, #tpu.memory_space<vmem>>, vector<1x8x128xf32>
    tpu.vector_store %arg6[%c0_21, %c0_22, %c0_23], %90 {strides = array<i32>} : memref<1x8x128xf32, #tpu.memory_space<vmem>>, vector<1x8x128xf32>,
    return
  }
  func.func @transform_0(%arg0: i32) -> (i32, i32) {
    %c0_i32 = arith.constant 0 : i32
    %c0_i32_0 = arith.constant 0 : i32
    return %arg0, %c0_i32 : i32, i32
  }
  func.func @transform_1(%arg0: i32) -> (i32, i32) {
    %c0_i32 = arith.constant 0 : i32
    %c0_i32_0 = arith.constant 0 : i32
    %c0_i32_1 = arith.constant 0 : i32
    return %c0_i32, %c0_i32_0 : i32, i32
  }
  func.func @transform_2(%arg0: i32) -> (i32, i32) {
    %c0_i32 = arith.constant 0 : i32
    %c0_i32_0 = arith.constant 0 : i32
    %c0_i32_1 = arith.constant 0 : i32
    return %c0_i32, %c0_i32_0 : i32, i32
  }
  func.func @transform_3(%arg0: i32) -> (i32, i32) {
    %c0_i32 = arith.constant 0 : i32
    %c0_i32_0 = arith.constant 0 : i32
    %c0_i32_1 = arith.constant 0 : i32
    return %c0_i32, %c0_i32_0 : i32, i32
  }
  func.func @transform_4(%arg0: i32) -> (i32, i32) {
    %c0_i32 = arith.constant 0 : i32
    %c0_i32_0 = arith.constant 0 : i32
    %c0_i32_1 = arith.constant 0 : i32
    return %c0_i32, %c0_i32_0 : i32, i32
  }
  func.func @transform_5(%arg0: i32) -> (i32, i32, i32) {
    %c0_i32 = arith.constant 0 : i32
    %c0_i32_0 = arith.constant 0 : i32
    %c0_i32_1 = arith.constant 0 : i32
    return %arg0, %c0_i32, %c0_i32_0 : i32, i32, i32
  }
}

</mosaic_0001>

<llo_original>
// kernel: ddpm_forward.3
$region0: #{ddpm_forward.3}
  #allocation0 [shape = 'u32[]', space=smem, size = 0x4, offset = 0x4, fixed_abs, tag = 'smem constant byte address 0x4 - core index']
  #allocation1 [shape = 'u32[72,128]{1,0:T(1,128)}', space=vmem, size = 0x9000, scoped, tag = 'internal scratch']
  %s0 = inlined_call_operand.vmem [shape: f32[16,48], index: 0, kind: input, shape index: {}]
  %s1 = inlined_call_operand.vmem [shape: bf16[48,128], index: 1, kind: input, shape index: {}]
  %s2 = inlined_call_operand.vmem [shape: f32[1,128], index: 2, kind: input, shape index: {}]
  %s3 = inlined_call_operand.vmem [shape: bf16[128,16], index: 3, kind: input, shape index: {}]
  %s4 = inlined_call_operand.vmem [shape: f32[1,16], index: 4, kind: input, shape index: {}]
  %s5 = inlined_call_operand.vmem [shape: f32[1,8,128], index: 5, kind: output, shape index: {}]
  %s6 = sld [smem:[#allocation0]]
  $region30: #{ddpm_forward.3} parent=0
    _
  %s8 = ssub.s32 1, %s6
  %s9 = scalar_select 0, %s8, %s6
  // Predicated region
  $region2: #{ddpm_forward.3} parent=0 // pred_check
    _
  $region3: #{ddpm_forward.3} parent=0 // pred_check_branch
    %11 = sbr.rel (0) target = $region5
  $region4: #{ddpm_forward.3} parent=0 // pred_region
    _
  $region5: #{ddpm_forward.3} parent=0 // pred_fallthru
    _
  // Predicated region
  $region6: #{ddpm_forward.3} parent=0 // pred_check
    _
  $region7: #{ddpm_forward.3} parent=0 // pred_check_branch
    %13 = sbr.rel (0) target = $region9
  $region8: #{ddpm_forward.3} parent=0 // pred_region
    _
  $region9: #{ddpm_forward.3} parent=0 // pred_fallthru
    _
  // Predicated region
  $region10: #{ddpm_forward.3} parent=0 // pred_check
    _
  $region11: #{ddpm_forward.3} parent=0 // pred_check_branch
    %15 = sbr.rel (0) target = $region13
  $region12: #{ddpm_forward.3} parent=0 // pred_region
    _
  $region13: #{ddpm_forward.3} parent=0 // pred_fallthru
    _
  // Predicated region
  $region14: #{ddpm_forward.3} parent=0 // pred_check
    _
  $region15: #{ddpm_forward.3} parent=0 // pred_check_branch
    %17 = sbr.rel (0) target = $region17
  $region16: #{ddpm_forward.3} parent=0 // pred_region
    _
  $region17: #{ddpm_forward.3} parent=0 // pred_fallthru
    _
  // Predicated region
  $region18: #{ddpm_forward.3} parent=0 // pred_check
    _
  $region19: #{ddpm_forward.3} parent=0 // pred_check_branch
    %19 = sbr.rel (0) target = $region21
  $region20: #{ddpm_forward.3} parent=0 // pred_region
    _
  $region21: #{ddpm_forward.3} parent=0 // pred_fallthru
    _
  %v21 = vld [vmem:[%s0] sm:$0xff]
  %v22 = vld [vmem:[%s0 + $0x8] sm:$0xff]
  %v23 = vlaneseq
  %v24 = vand.u32 %v23, 127
  %vm25 = vcmp.lt.s32.totalorder %v24, 16
  %v26 = vsel %vm25, 1, 0
  %v27 = vcvt.s32.f32 %v26
  %vm28 = vcmp.ge.s32.totalorder %v24, 16
  %vm29 = vcmp.lt.s32.totalorder %v24, 32
  %vm30 = vmand %vm28, %vm29
  %v31 = vsel %vm30, 1, 0
  %v32 = vcvt.s32.f32 %v31
  %vm33 = vcmp.ge.s32.totalorder %v24, 32
  %vm34 = vcmp.lt.s32.totalorder %v24, 36
  %vm35 = vmand %vm33, %vm34
  %v36 = vsel %vm35, 1, 0
  %v37 = vcvt.s32.f32 %v36
  %vm38 = vcmp.eq.s32.totalorder %v24, 36
  %v39 = vsel %vm38, 1, 0
  %v40 = vcvt.s32.f32 %v39
  %42 = vset.pattern.permute.xlu0 37
  %43 = vperm.xlu0 %42, %v21
  %v44 = vpop.permute.xlu0 %43
  %47 = vset.pattern.permute.xlu0 37
  %48 = vperm.xlu0 %47, %v22
  %v49 = vpop.permute.xlu0 %48
  %v51 = vmul.f32 %v27, %v44
  %v52 = vmul.f32 %v27, %v49
  %v53 = vadd.f32 %v40, %v51
  %v54 = vadd.f32 %v40, %v52
  %55 = vset.pattern.permute.xlu0 38
  %56 = vperm.xlu0 %55, %v21
  %v57 = vpop.permute.xlu0 %56
  %59 = vset.pattern.permute.xlu0 38
  %60 = vperm.xlu0 %59, %v22
  %v61 = vpop.permute.xlu0 %60
  %v63 = vmul.f32 %v32, %v57
  %v64 = vmul.f32 %v32, %v61
  %v65 = vadd.f32 %v53, %v63
  %v66 = vadd.f32 %v54, %v64
  %67 = vset.pattern.permute.xlu0 39
  %68 = vperm.xlu0 %67, %v21
  %v69 = vpop.permute.xlu0 %68
  %71 = vset.pattern.permute.xlu0 39
  %72 = vperm.xlu0 %71, %v22
  %v73 = vpop.permute.xlu0 %72
  %v75 = vmul.f32 %v37, %v69
  %v76 = vmul.f32 %v37, %v73
  %v77 = vadd.f32 %v65, %v75
  %v78 = vadd.f32 %v66, %v76
  %v79 = vmul.f32 %v77, %v21
  %v80 = vmul.f32 %v78, %v22
  %v81 = vpack.c.bf16 %v80, %v79
  %v82 = vld [vmem:[%s1] sm:$0xf]
  %v83 = vld [vmem:[%s1 + $0x4] sm:$0xf]
  %v84 = vld [vmem:[%s1 + $0x8] sm:$0xf]
  %v85 = vld [vmem:[%s1 + $0xc] sm:$0xf]
  %v86 = vld [vmem:[%s1 + $0x10] sm:$0xf]
  %v87 = vld [vmem:[%s1 + $0x14] sm:$0xf]
  %v88 = vld [vmem:[%s2] sm:$0x1]
  %v90 = vperm.slane %v88, 0
  %v98 = vunpack.c.l.b16 %v82
  %v99 = vunpack.c.l.b16 %v83
  %v100 = vunpack.c.l.b16 %v84
  %v101 = vunpack.c.l.b16 %v85
  %v102 = vunpack.c.l.b16 %v86
  %v103 = vunpack.c.l.b16 %v87
  %v104 = vpack.c.b16 %v99, %v98
  %v105 = vpack.c.b16 %v101, %v100
  %v106 = vpack.c.b16 %v103, %v102
  %vm110 = vcmask 392192
  %v112 = vsel %vm110, %v81, 0
  %114 = vmatpush.bf16.msra.mxu0 0
  %115 = vmatpush.bf16.msra.mxu0 0
  %116 = vmatpush.bf16.msra.mxu0 0
  %117 = vmatpush.bf16.msra.mxu0 0
  %118 = vmatpush.bf16.msra.mxu0 0
  %119 = vmatpush.bf16.msra.mxu0 %v106
  %120 = vmatpush.bf16.msra.mxu0 %v105
  %121 = vmatpush.bf16.msra.mxu0 %v104
  %122 = vmatmul.bf16.gmra.mxu0 %v112
  %v123 = vpop.f32.mrf.mxu0
  %v124 = vadd.f32 %v90, %v123
  %v125 = vpop.f32.mrf.mxu0
  %v126 = vadd.f32 %v90, %v125
  %127 = vdwg.mxu0
  %v128 = vmax.f32 %v124, 0.0
  %v129 = vmax.f32 %v126, 0.0
  %v130 = vpack.c.bf16 %v129, %v128
  %v131 = vld [vmem:[%s3] sm:$0xf]
  %v132 = vld [vmem:[%s3 + $0x4] sm:$0xf]
  %v133 = vld [vmem:[%s3 + $0x8] sm:$0xf]
  %v134 = vld [vmem:[%s3 + $0xc] sm:$0xf]
  %v135 = vld [vmem:[%s3 + $0x10] sm:$0xf]
  %v136 = vld [vmem:[%s3 + $0x14] sm:$0xf]
  %v137 = vld [vmem:[%s3 + $0x18] sm:$0xf]
  %v138 = vld [vmem:[%s3 + $0x1c] sm:$0xf]
  %v139 = vld [vmem:[%s3 + $0x20] sm:$0xf]
  %v140 = vld [vmem:[%s3 + $0x24] sm:$0xf]
  %v141 = vld [vmem:[%s3 + $0x28] sm:$0xf]
  %v142 = vld [vmem:[%s3 + $0x2c] sm:$0xf]
  %v143 = vld [vmem:[%s3 + $0x30] sm:$0xf]
  %v144 = vld [vmem:[%s3 + $0x34] sm:$0xf]
  %v145 = vld [vmem:[%s3 + $0x38] sm:$0xf]
  %v146 = vld [vmem:[%s3 + $0x3c] sm:$0xf]
  %v147 = vld [vmem:[%s4] sm:$0x1]
  %v149 = vperm.slane %v147, 0
  %v167 = vunpack.c.l.b16 %v131
  %v168 = vunpack.c.l.b16 %v132
  %v169 = vunpack.c.l.b16 %v133
  %v170 = vunpack.c.l.b16 %v134
  %v171 = vunpack.c.l.b16 %v135
  %v172 = vunpack.c.l.b16 %v136
  %v173 = vunpack.c.l.b16 %v137
  %v174 = vunpack.c.l.b16 %v138
  %v175 = vunpack.c.l.b16 %v139
  %v176 = vunpack.c.l.b16 %v140
  %v177 = vunpack.c.l.b16 %v141
  %v178 = vunpack.c.l.b16 %v142
  %v179 = vunpack.c.l.b16 %v143
  %v180 = vunpack.c.l.b16 %v144
  %v181 = vunpack.c.l.b16 %v145
  %v182 = vunpack.c.l.b16 %v146
  %v183 = vpack.c.b16 %v168, %v167
  %v184 = vpack.c.b16 %v170, %v169
  %v185 = vpack.c.b16 %v172, %v171
  %v186 = vpack.c.b16 %v174, %v173
  %v187 = vpack.c.b16 %v176, %v175
  %v188 = vpack.c.b16 %v178, %v177
  %v189 = vpack.c.b16 %v180, %v179
  %v190 = vpack.c.b16 %v182, %v181
  %199 = vmatpush.bf16.msra.mxu0 %v190
  %200 = vmatpush.bf16.msra.mxu0 %v189
  %201 = vmatpush.bf16.msra.mxu0 %v188
  %202 = vmatpush.bf16.msra.mxu0 %v187
  %203 = vmatpush.bf16.msra.mxu0 %v186
  %204 = vmatpush.bf16.msra.mxu0 %v185
  %205 = vmatpush.bf16.msra.mxu0 %v184
  %206 = vmatpush.bf16.msra.mxu0 %v183
  %207 = vmatmul.bf16.gmra.mxu0 %v130
  %v208 = vpop.f32.mrf.mxu0
  %v209 = vadd.f32 %v149, %v208
  %v210 = vpop.f32.mrf.mxu0
  %v211 = vadd.f32 %v149, %v210
  %212 = vdwg.mxu0
  %215 = vrot.lane.b32.xlu0 %v209, 16
  %v216 = vpop.permute.xlu0 %215
  %217 = vrot.lane.b32.xlu0 %v211, 16
  %v218 = vpop.permute.xlu0 %217
  %v221 = vsub.f32 %v21, %v216
  %v222 = vsub.f32 %v22, %v218
  %v223 = vmul.f32 %v221, %v221
  %v224 = vmul.f32 %v222, %v222
  %227 = vrot.lane.b32.xlu0 %v223, 112
  %v228 = vpop.permute.xlu0 %227
  %229 = vrot.lane.b32.xlu0 %v224, 112
  %v230 = vpop.permute.xlu0 %229
  %vm233 = vcmask 130048
  %v234 = vsel %vm233, %v228, 0.0
  %235 = vadd.xlane.f32.xlu0 %v234
  %v236 = vpop.xlane.xlu0 %235
  %v237 = vsel %vm233, %v230, 0.0
  %238 = vadd.xlane.f32.xlu0 %v237
  %v239 = vpop.xlane.xlu0 %238
  %v240 = vmul.f32 %v236, %v21
  %v241 = vmul.f32 %v239, %v22
  %244 = vrot.lane.b32.xlu0 %v240, 87
  %v245 = vpop.permute.xlu0 %244
  %246 = vrot.lane.b32.xlu0 %v241, 87
  %v247 = vpop.permute.xlu0 %246
  %vm250 = vcmask 7168
  %v251 = vsel %vm250, %v245, 0.0
  %v252 = vsel %vm250, %v247, 0.0
  %v253 = vadd.f32 %v251, %v252
  %254 = vadd.xlane.f32.xlu0 %v253
  %v255 = vpop.xlane.xlu0 %254
  %v256 = vrot.slane %v255, 4
  %v257 = vadd.f32 %v255, %v256
  %v258 = vrot.slane %v257, 2
  %v259 = vadd.f32 %v257, %v258
  %v260 = vrot.slane %v259, 1
  %v261 = vadd.f32 %v259, %v260
  %s262 = vtos %v261
  %263 = vrot.lane.b32.xlu0 %v21, 1
  %v264 = vpop.permute.xlu0 %263
  %265 = vrot.lane.b32.xlu0 %v22, 1
  %v266 = vpop.permute.xlu0 %265
  %v269 = vmul.f32 %v240, %v264
  %v270 = vmul.f32 %v241, %v266
  %273 = vrot.lane.b32.xlu0 %v269, 87
  %v274 = vpop.permute.xlu0 %273
  %275 = vrot.lane.b32.xlu0 %v270, 87
  %v276 = vpop.permute.xlu0 %275
  %v279 = vsel %vm250, %v274, 0.0
  %v280 = vsel %vm250, %v276, 0.0
  %v281 = vadd.f32 %v279, %v280
  %282 = vadd.xlane.f32.xlu0 %v281
  %v283 = vpop.xlane.xlu0 %282
  %v284 = vrot.slane %v283, 4
  %v285 = vadd.f32 %v283, %v284
  %v286 = vrot.slane %v285, 2
  %v287 = vadd.f32 %v285, %v286
  %v288 = vrot.slane %v287, 1
  %v289 = vadd.f32 %v287, %v288
  %s290 = vtos %v289
  %s291 = smul.f32 %s290, 0.0625
  %v292 = vlaneseq
  %v293 = vshrl.u32 %v292, 7
  %vm294 = vcmp.eq.s32.totalorder %v293, 0
  %vm295 = vcmp.eq.s32.totalorder %v24, 0
  %vm296 = vmand %vm294, %vm295
  %vm297 = vcmp.eq.s32.totalorder %v24, 1
  %vm298 = vmand %vm294, %vm297
  %v299 = vstv %s291
  %v300 = vsel %vm298, %v299, 0.0
  %v301 = vstv %s262
  %v302 = vsel %vm296, %v301, %v300
  %303 = vst [vmem:[%s5] sm:$0xff] %v302
  // Predicated region
  $region22: #{ddpm_forward.3} parent=0 // pred_check
    _
  $region23: #{ddpm_forward.3} parent=0 // pred_check_branch
    %305 = sbr.rel (0) target = $region25
  $region24: #{ddpm_forward.3} parent=0 // pred_region
    _
  $region25: #{ddpm_forward.3} parent=0 // pred_fallthru
    _
  // Predicated region
  $region26: #{ddpm_forward.3} parent=0 // pred_check
    _
  $region27: #{ddpm_forward.3} parent=0 // pred_check_branch
    %307 = sbr.rel (0) target = $region29
  $region28: #{ddpm_forward.3} parent=0 // pred_region
    _
  $region29: #{ddpm_forward.3} parent=0 // pred_fallthru
    _

</llo_original>
